<compile_context>
chip_gen: v5e
topology: v5e:2x2
jax: 0.10.0
libtpu: 0.0.40
codegen_flags: <defaults>
</compile_context>

<pallas_src>
import functools

import jax
import jax.numpy as jnp
from jax import lax
from jax.experimental import pallas as pl
from jax.experimental.pallas import tpu as pltpu


_GRAN = 1024          # D-block granularity; also the in-kernel l1 chunk width


def _round_up(x, m):
    return (x + m - 1) // m * m


def _round_down(x, m):
    return x // m * m


def _vmem_limit_bytes():
    """Per-chip VMEM request: ~3/4 of physical, capped at 96 MiB.

    v5e/v6e (128 MiB physical) -> 96 MiB; v7x (64 MiB) -> 48 MiB.
    Falls back to the conservative 48 MiB if the query is unavailable.
    """
    cap = 64 << 20
    try:
        info = pltpu.get_tpu_info()
        cap = int(getattr(info, "vmem_capacity_bytes", cap))
    except Exception:
        pass
    return max(16 << 20, min(cap * 3 // 4, 96 << 20))


def _plan_tiles(n, d, itemsize, metric, vmem_limit, block_d_cap=None):
    """Returns (block_d, num_d_blocks_per_split, n_splits)."""
    # Budget for the double-buffered layer pipeline: <= 16 MiB per block and
    # <= (vmem_limit - reserve) / 2 buffers.  >= ~2 MiB so the HBM pipe stays
    # full and per-grid-step overhead is amortized.
    max_block_bytes = min(16 << 20, max((vmem_limit - (8 << 20)) // 2, 2 << 20))
    cap = max_block_bytes // (n * itemsize)
    cap = max(_round_down(cap, _GRAN), _GRAN)
    if block_d_cap is not None:
        cap = min(cap, max(_round_down(block_d_cap, _GRAN), _GRAN))

    if d <= cap:
        # Whole feature dim in a single block per grid step.
        if metric == "l1" and d > _GRAN:
            block_d = _round_up(d, _GRAN)     # pad so the chunk loop divides evenly
        else:
            block_d = d
        return block_d, 1, 1

    # Multi-block reduction: split the D-block range in half across the
    # leading "parallel" grid axis (both TensorCores on v7x).
    n_splits = 2
    num_blocks = _round_up(-(-d // cap), n_splits)
    block_d = _round_up(-(-d // num_blocks), _GRAN)
    num_blocks = _round_up(-(-d // block_d), n_splits)
    return block_d, num_blocks // n_splits, n_splits


# --------------------------------- kernels ----------------------------------
def _gram_partial_kernel(layer_ref, out_ref):
    """Accumulate X @ X.T (f32) over the D-tile reduction axis (grid axis 1)."""
    @pl.when(pl.program_id(1) == 0)
    def _():
        out_ref[...] = jnp.zeros_like(out_ref)

    x = layer_ref[...]                               # (N, block_d), original dtype
    # Contract axis 1 of BOTH operands -> no transposed (D, N) operand is
    # materialized; accumulation is f32 on the MXU.
    gram = lax.dot_general(
        x, x,
        dimension_numbers=(((1,), (1,)), ((), ())),
        preferred_element_type=jnp.float32,
    )
    out_ref[...] += gram[None, :, :]


def _l1_partial_kernel(layer_ref, out_ref, *, chunk):
    """Accumulate pairwise |row_j - row_i| sums over the D-tile reduction axis."""
    n, block_d = layer_ref.shape
    num_chunks = block_d // chunk

    @pl.when(pl.program_id(1) == 0)
    def _():
        out_ref[...] = jnp.zeros_like(out_ref)

    # Hoisted once per grid step (JAX does not CSE broadcasted iota).
    lane_id = lax.broadcasted_iota(jnp.int32, (n, n), dimension=1)

    def chunk_tile(xc):
        # xc: (n, chunk) f32.  tile[r, i] = sum_d |xc[r, d] - xc[i, d]|.
        tile = jnp.zeros((n, n), jnp.float32)
        for i in range(n):                           # n is small & static
            col = jnp.sum(jnp.abs(xc - xc[i:i + 1, :]), axis=-1, keepdims=True)
            tile = tile + jnp.where(lane_id == i, col, 0.0)
        return tile

    if num_chunks == 1:
        acc = chunk_tile(layer_ref[...].astype(jnp.float32))
    else:
        def body(c, acc):
            off = pl.multiple_of(c * chunk, chunk)
            xc = layer_ref[:, pl.ds(off, chunk)].astype(jnp.float32)
            return acc + chunk_tile(xc)
        acc = lax.fori_loop(0, num_chunks, body,
                            jnp.zeros((n, n), jnp.float32),
                            unroll=num_chunks <= 8)

    # One dense (N, N) accumulator update per grid step.
    out_ref[...] += acc[None, :, :]


# --------------------------------- wrapper ----------------------------------
def diversity_loss(noises, layer, metric, *, block_d_cap=None):
    """Pallas-backed DiversityLoss(metric).forward(noises, layer)."""
    if metric not in ("l1", "l2", "cosine"):
        raise ValueError(metric)
    if layer.ndim > 2:
        layer = layer.reshape(layer.shape[0], -1)
    n, d = layer.shape

    vmem_limit = _vmem_limit_bytes()
    block_d, num_d, n_splits = _plan_tiles(
        n, d, layer.dtype.itemsize, metric, vmem_limit, block_d_cap)

    d_padded = block_d * num_d * n_splits
    if d_padded != d:
        # Zero padding is exact for all three metrics (padded columns
        # contribute nothing); the epilogue divides by the true d.
        layer = jnp.pad(layer, ((0, 0), (0, d_padded - d)))

    if metric == "l1":
        kernel = functools.partial(_l1_partial_kernel, chunk=min(block_d, _GRAN))
    else:
        kernel = _gram_partial_kernel

    partials = pl.pallas_call(
        kernel,
        out_shape=jax.ShapeDtypeStruct((n_splits, n, n), jnp.float32),
        grid_spec=pltpu.PrefetchScalarGridSpec(
            num_scalar_prefetch=0,
            grid=(n_splits, num_d),                     # reduction axis last
            in_specs=[
                # Layer stays in its original dtype (bf16-friendly); the MXU
                # consumes it natively, l1 casts per chunk.
                pl.BlockSpec((n, block_d),
                             lambda s, di: (0, s * num_d + di)),
            ],
            out_specs=pl.BlockSpec((1, n, n), lambda s, di: (s, 0, 0)),
        ),
        compiler_params=pltpu.CompilerParams(
            dimension_semantics=("parallel", "arbitrary"),
            vmem_limit_bytes=int(vmem_limit),
        ),
    )(layer)

    # ---------------- tiny O(N^2) epilogue in plain JAX (per review) ----------
    acc = partials.sum(axis=0)                          # (N, N) f32
    inv_d = jnp.float32(1.0 / d)
    if metric == "l2":
        sq = jnp.diagonal(acc)[:, None]                 # ||row||^2 from the gram diag
        layer_dist = jnp.maximum(sq + sq.T - 2.0 * acc, 0.0) * inv_d
    elif metric == "cosine":
        sq = jnp.diagonal(acc)[:, None]
        # 1/max(||a||*||b||, 1e-8) == rsqrt(max(||a||^2*||b||^2, 1e-16))
        inv_norm = lax.rsqrt(jnp.maximum(sq * sq.T, jnp.float32(1e-16)))
        layer_dist = 1.0 - acc * inv_norm
    else:                                               # l1
        layer_dist = acc * inv_d

    nz = noises.astype(jnp.float32)
    diff = nz[None, :, :] - nz[:, None, :]
    noise_dist = jnp.mean(diff * diff, axis=2)          # pairwise 'l2' mean
    return jnp.exp(jnp.mean(-noise_dist * layer_dist))


# ---------------- pure-JAX reference (mirrors the PyTorch module) ------------
def _ref_pairwise(t, how):
    t = t.astype(jnp.float32)
    n, d = t.shape
    t1 = jnp.broadcast_to(t[None, :, :], (n, n, d))     # tensor.expand((n, n, d))
    t2 = t[:, None, :]                                  # tensor.unsqueeze(1)
    if how == "l1":
        return jnp.mean(jnp.abs(t1 - t2), axis=2)
    if how == "l2":
        return jnp.mean((t1 - t2) ** 2, axis=2)
    if how == "cosine":
        num = jnp.sum(t1 * t2, axis=2)
        den = jnp.maximum(
            jnp.linalg.norm(t1, axis=2) * jnp.linalg.norm(t2, axis=2), 1e-8)
        return 1.0 - num / den
    raise ValueError(how)


def ref_diversity_loss(noises, layer, metric):
    if layer.ndim > 2:
        layer = layer.reshape(layer.shape[0], -1)
    layer_dist = _ref_pairwise(layer, metric)
    noise_dist = _ref_pairwise(noises, "l2")
    return jnp.exp(jnp.mean(-noise_dist * layer_dist))


if __name__ == "__main__":
    key = jax.random.PRNGKey(0)
    k_noise, k_small, k_mid, k_odd = jax.random.split(key, 4)

    N, K = 8, 32
    noises = jax.random.normal(k_noise, (N, K), dtype=jnp.float32)

    failures = []

    def check(tag, layer, metric, **kw):
        out = jax.block_until_ready(diversity_loss(noises, layer, metric, **kw))
        ref = ref_diversity_loss(noises, layer, metric)
        if not bool(jnp.allclose(out, ref, rtol=1e-4, atol=1e-5)):
            failures.append((tag, metric, float(out), float(ref)))

    # 1) single-block path (D = 64 fits in one block, one grid step).
    layer_small = jax.random.normal(k_small, (N, 4, 4, 4), dtype=jnp.float32)
    for metric in ("l1", "l2", "cosine"):
        check("single-block", layer_small, metric)

    # 2) D-tiled reduction split across the parallel axis
    #    (D = 4096, block_d = 1024 -> grid (2, 2)).
    layer_mid = jax.random.normal(k_mid, (N, 8, 16, 32), dtype=jnp.float32)
    for metric in ("l1", "l2", "cosine"):
        check("tiled", layer_mid, metric, block_d_cap=1024)

    # 3) zero-padded + multi-chunk l1 path
    #    (D = 3000 -> padded 4096, block_d = 2048, two 1024-col chunks).
    layer_odd = jax.random.normal(k_odd, (N, 5, 20, 30), dtype=jnp.float32)
    for metric in ("l1", "l2", "cosine"):
        check("padded", layer_odd, metric, block_d_cap=2048)

    if failures:
        for tag, metric, out, ref in failures:
            print(f"MISMATCH [{tag}] metric={metric}: pallas={out} ref={ref}")
    else:
        print("KERNEL_OK")
</pallas_src>

<mosaic_0001>
module attributes {stable_mosaic.version = 11 : i64} {
  func.func @_l1_partial_kernel(%arg0: i32, %arg1: i32, %arg2: memref<8x64xf32, #tpu.memory_space<vmem>>, %arg3: memref<1x8x8xf32, #tpu.memory_space<vmem>>) attributes {dimension_semantics = [#tpu.dimension_semantics<parallel>, #tpu.dimension_semantics<arbitrary>], iteration_bounds = array<i64: 1, 1>, scalar_prefetch = 0 : i64, scratch_operands = 0 : i64, tpu.core_type = #tpu.core_type<tc>, window_params = [{transform_indices = @transform_0, window_bounds = array<i64: 8, 64>}, {transform_indices = @transform_1, window_bounds = array<i64: 1, 8, 8>}]} {
    %c0_i32 = arith.constant 0 : i32
    %0 = arith.cmpi eq, %arg1, %c0_i32 : i32
    %1 = arith.extui %0 : i1 to i32
    %c0_i32_0 = arith.constant 0 : i32
    %2 = arith.cmpi ne, %1, %c0_i32_0 : i32
    scf.if %2 {
      %cst_25 = arith.constant 0.000000e+00 : f32
      %114 = vector.broadcast %cst_25 : f32 to vector<1x8x8xf32>
      %c0_26 = arith.constant 0 : index
      %c0_27 = arith.constant 0 : index
      %c0_28 = arith.constant 0 : index
      %115 = vector.load %arg3[%c0_26, %c0_27, %c0_28] : memref<1x8x8xf32, #tpu.memory_space<vmem>>, vector<1x8x8xf32>
      tpu.vector_store %arg3[%c0_26, %c0_27, %c0_28], %114 {strides = array<i32>} : memref<1x8x8xf32, #tpu.memory_space<vmem>>, vector<1x8x8xf32>,
    } else {
    }
    %3 = tpu.iota {dimensions = array<i32: 1>} : vector<8x8xi32>
    %c0 = arith.constant 0 : index
    %c0_1 = arith.constant 0 : index
    %4 = vector.load %arg2[%c0, %c0_1] : memref<8x64xf32, #tpu.memory_space<vmem>>, vector<8x64xf32>
    %cst = arith.constant 0.000000e+00 : f32
    %5 = vector.broadcast %cst : f32 to vector<8x8xf32>
    %6 = vector.extract_strided_slice %4 {offsets = [0, 0], sizes = [1, 64], strides = [1, 1]} : vector<8x64xf32> to vector<1x64xf32>
    %7 = vector.broadcast %6 : vector<1x64xf32> to vector<8x64xf32>
    %8 = arith.subf %4, %7 : vector<8x64xf32>
    %9 = math.absf %8 : vector<8x64xf32>
    %cst_2 = arith.constant dense<0.000000e+00> : vector<8xf32>
    %10 = vector.multi_reduction <add>, %9, %cst_2 [1] : vector<8x64xf32> to vector<8xf32>
    %11 = vector.shape_cast %10 : vector<8xf32> to vector<8x1xf32>
    %c0_i32_3 = arith.constant 0 : i32
    %12 = vector.broadcast %c0_i32_3 : i32 to vector<8x8xi32>
    %13 = arith.cmpi eq, %3, %12 : vector<8x8xi32>
    %cst_4 = arith.constant 0.000000e+00 : f32
    %14 = vector.shape_cast %11 : vector<8x1xf32> to vector<8x1xf32>
    %15 = vector.broadcast %14 : vector<8x1xf32> to vector<8x8xf32>
    %16 = vector.broadcast %cst_4 : f32 to vector<8x8xf32>
    %17 = arith.select %13, %15, %16 : vector<8x8xi1>, vector<8x8xf32>
    %18 = arith.addf %5, %17 : vector<8x8xf32>
    %19 = vector.extract_strided_slice %4 {offsets = [1, 0], sizes = [1, 64], strides = [1, 1]} : vector<8x64xf32> to vector<1x64xf32>
    %20 = vector.broadcast %19 : vector<1x64xf32> to vector<8x64xf32>
    %21 = arith.subf %4, %20 : vector<8x64xf32>
    %22 = math.absf %21 : vector<8x64xf32>
    %cst_5 = arith.constant dense<0.000000e+00> : vector<8xf32>
    %23 = vector.multi_reduction <add>, %22, %cst_5 [1] : vector<8x64xf32> to vector<8xf32>
    %24 = vector.shape_cast %23 : vector<8xf32> to vector<8x1xf32>
    %c1_i32 = arith.constant 1 : i32
    %25 = vector.broadcast %c1_i32 : i32 to vector<8x8xi32>
    %26 = arith.cmpi eq, %3, %25 : vector<8x8xi32>
    %cst_6 = arith.constant 0.000000e+00 : f32
    %27 = vector.shape_cast %24 : vector<8x1xf32> to vector<8x1xf32>
    %28 = vector.broadcast %27 : vector<8x1xf32> to vector<8x8xf32>
    %29 = vector.broadcast %cst_6 : f32 to vector<8x8xf32>
    %30 = arith.select %26, %28, %29 : vector<8x8xi1>, vector<8x8xf32>
    %31 = arith.addf %18, %30 : vector<8x8xf32>
    %32 = vector.extract_strided_slice %4 {offsets = [2, 0], sizes = [1, 64], strides = [1, 1]} : vector<8x64xf32> to vector<1x64xf32>
    %33 = vector.broadcast %32 : vector<1x64xf32> to vector<8x64xf32>
    %34 = arith.subf %4, %33 : vector<8x64xf32>
    %35 = math.absf %34 : vector<8x64xf32>
    %cst_7 = arith.constant dense<0.000000e+00> : vector<8xf32>
    %36 = vector.multi_reduction <add>, %35, %cst_7 [1] : vector<8x64xf32> to vector<8xf32>
    %37 = vector.shape_cast %36 : vector<8xf32> to vector<8x1xf32>
    %c2_i32 = arith.constant 2 : i32
    %38 = vector.broadcast %c2_i32 : i32 to vector<8x8xi32>
    %39 = arith.cmpi eq, %3, %38 : vector<8x8xi32>
    %cst_8 = arith.constant 0.000000e+00 : f32
    %40 = vector.shape_cast %37 : vector<8x1xf32> to vector<8x1xf32>
    %41 = vector.broadcast %40 : vector<8x1xf32> to vector<8x8xf32>
    %42 = vector.broadcast %cst_8 : f32 to vector<8x8xf32>
    %43 = arith.select %39, %41, %42 : vector<8x8xi1>, vector<8x8xf32>
    %44 = arith.addf %31, %43 : vector<8x8xf32>
    %45 = vector.extract_strided_slice %4 {offsets = [3, 0], sizes = [1, 64], strides = [1, 1]} : vector<8x64xf32> to vector<1x64xf32>
    %46 = vector.broadcast %45 : vector<1x64xf32> to vector<8x64xf32>
    %47 = arith.subf %4, %46 : vector<8x64xf32>
    %48 = math.absf %47 : vector<8x64xf32>
    %cst_9 = arith.constant dense<0.000000e+00> : vector<8xf32>
    %49 = vector.multi_reduction <add>, %48, %cst_9 [1] : vector<8x64xf32> to vector<8xf32>
    %50 = vector.shape_cast %49 : vector<8xf32> to vector<8x1xf32>
    %c3_i32 = arith.constant 3 : i32
    %51 = vector.broadcast %c3_i32 : i32 to vector<8x8xi32>
    %52 = arith.cmpi eq, %3, %51 : vector<8x8xi32>
    %cst_10 = arith.constant 0.000000e+00 : f32
    %53 = vector.shape_cast %50 : vector<8x1xf32> to vector<8x1xf32>
    %54 = vector.broadcast %53 : vector<8x1xf32> to vector<8x8xf32>
    %55 = vector.broadcast %cst_10 : f32 to vector<8x8xf32>
    %56 = arith.select %52, %54, %55 : vector<8x8xi1>, vector<8x8xf32>
    %57 = arith.addf %44, %56 : vector<8x8xf32>
    %58 = vector.extract_strided_slice %4 {offsets = [4, 0], sizes = [1, 64], strides = [1, 1]} : vector<8x64xf32> to vector<1x64xf32>
    %59 = vector.broadcast %58 : vector<1x64xf32> to vector<8x64xf32>
    %60 = arith.subf %4, %59 : vector<8x64xf32>
    %61 = math.absf %60 : vector<8x64xf32>
    %cst_11 = arith.constant dense<0.000000e+00> : vector<8xf32>
    %62 = vector.multi_reduction <add>, %61, %cst_11 [1] : vector<8x64xf32> to vector<8xf32>
    %63 = vector.shape_cast %62 : vector<8xf32> to vector<8x1xf32>
    %c4_i32 = arith.constant 4 : i32
    %64 = vector.broadcast %c4_i32 : i32 to vector<8x8xi32>
    %65 = arith.cmpi eq, %3, %64 : vector<8x8xi32>
    %cst_12 = arith.constant 0.000000e+00 : f32
    %66 = vector.shape_cast %63 : vector<8x1xf32> to vector<8x1xf32>
    %67 = vector.broadcast %66 : vector<8x1xf32> to vector<8x8xf32>
    %68 = vector.broadcast %cst_12 : f32 to vector<8x8xf32>
    %69 = arith.select %65, %67, %68 : vector<8x8xi1>, vector<8x8xf32>
    %70 = arith.addf %57, %69 : vector<8x8xf32>
    %71 = vector.extract_strided_slice %4 {offsets = [5, 0], sizes = [1, 64], strides = [1, 1]} : vector<8x64xf32> to vector<1x64xf32>
    %72 = vector.broadcast %71 : vector<1x64xf32> to vector<8x64xf32>
    %73 = arith.subf %4, %72 : vector<8x64xf32>
    %74 = math.absf %73 : vector<8x64xf32>
    %cst_13 = arith.constant dense<0.000000e+00> : vector<8xf32>
    %75 = vector.multi_reduction <add>, %74, %cst_13 [1] : vector<8x64xf32> to vector<8xf32>
    %76 = vector.shape_cast %75 : vector<8xf32> to vector<8x1xf32>
    %c5_i32 = arith.constant 5 : i32
    %77 = vector.broadcast %c5_i32 : i32 to vector<8x8xi32>
    %78 = arith.cmpi eq, %3, %77 : vector<8x8xi32>
    %cst_14 = arith.constant 0.000000e+00 : f32
    %79 = vector.shape_cast %76 : vector<8x1xf32> to vector<8x1xf32>
    %80 = vector.broadcast %79 : vector<8x1xf32> to vector<8x8xf32>
    %81 = vector.broadcast %cst_14 : f32 to vector<8x8xf32>
    %82 = arith.select %78, %80, %81 : vector<8x8xi1>, vector<8x8xf32>
    %83 = arith.addf %70, %82 : vector<8x8xf32>
    %84 = vector.extract_strided_slice %4 {offsets = [6, 0], sizes = [1, 64], strides = [1, 1]} : vector<8x64xf32> to vector<1x64xf32>
    %85 = vector.broadcast %84 : vector<1x64xf32> to vector<8x64xf32>
    %86 = arith.subf %4, %85 : vector<8x64xf32>
    %87 = math.absf %86 : vector<8x64xf32>
    %cst_15 = arith.constant dense<0.000000e+00> : vector<8xf32>
    %88 = vector.multi_reduction <add>, %87, %cst_15 [1] : vector<8x64xf32> to vector<8xf32>
    %89 = vector.shape_cast %88 : vector<8xf32> to vector<8x1xf32>
    %c6_i32 = arith.constant 6 : i32
    %90 = vector.broadcast %c6_i32 : i32 to vector<8x8xi32>
    %91 = arith.cmpi eq, %3, %90 : vector<8x8xi32>
    %cst_16 = arith.constant 0.000000e+00 : f32
    %92 = vector.shape_cast %89 : vector<8x1xf32> to vector<8x1xf32>
    %93 = vector.broadcast %92 : vector<8x1xf32> to vector<8x8xf32>
    %94 = vector.broadcast %cst_16 : f32 to vector<8x8xf32>
    %95 = arith.select %91, %93, %94 : vector<8x8xi1>, vector<8x8xf32>
    %96 = arith.addf %83, %95 : vector<8x8xf32>
    %97 = vector.extract_strided_slice %4 {offsets = [7, 0], sizes = [1, 64], strides = [1, 1]} : vector<8x64xf32> to vector<1x64xf32>
    %98 = vector.broadcast %97 : vector<1x64xf32> to vector<8x64xf32>
    %99 = arith.subf %4, %98 : vector<8x64xf32>
    %100 = math.absf %99 : vector<8x64xf32>
    %cst_17 = arith.constant dense<0.000000e+00> : vector<8xf32>
    %101 = vector.multi_reduction <add>, %100, %cst_17 [1] : vector<8x64xf32> to vector<8xf32>
    %102 = vector.shape_cast %101 : vector<8xf32> to vector<8x1xf32>
    %c7_i32 = arith.constant 7 : i32
    %103 = vector.broadcast %c7_i32 : i32 to vector<8x8xi32>
    %104 = arith.cmpi eq, %3, %103 : vector<8x8xi32>
    %cst_18 = arith.constant 0.000000e+00 : f32
    %105 = vector.shape_cast %102 : vector<8x1xf32> to vector<8x1xf32>
    %106 = vector.broadcast %105 : vector<8x1xf32> to vector<8x8xf32>
    %107 = vector.broadcast %cst_18 : f32 to vector<8x8xf32>
    %108 = arith.select %104, %106, %107 : vector<8x8xi1>, vector<8x8xf32>
    %109 = arith.addf %96, %108 : vector<8x8xf32>
    %c0_19 = arith.constant 0 : index
    %c0_20 = arith.constant 0 : index
    %c0_21 = arith.constant 0 : index
    %110 = vector.load %arg3[%c0_19, %c0_20, %c0_21] : memref<1x8x8xf32, #tpu.memory_space<vmem>>, vector<1x8x8xf32>
    %111 = vector.shape_cast %109 : vector<8x8xf32> to vector<1x8x8xf32>
    %112 = arith.addf %110, %111 : vector<1x8x8xf32>
    %c0_22 = arith.constant 0 : index
    %c0_23 = arith.constant 0 : index
    %c0_24 = arith.constant 0 : index
    %113 = vector.load %arg3[%c0_22, %c0_23, %c0_24] : memref<1x8x8xf32, #tpu.memory_space<vmem>>, vector<1x8x8xf32>
    tpu.vector_store %arg3[%c0_22, %c0_23, %c0_24], %112 {strides = array<i32>} : memref<1x8x8xf32, #tpu.memory_space<vmem>>, vector<1x8x8xf32>,
    return
  }
  func.func @transform_0(%arg0: i32, %arg1: i32) -> (i32, i32) {
    %c1_i32 = arith.constant 1 : i32
    %0 = arith.muli %arg0, %c1_i32 : i32
    %1 = arith.addi %0, %arg1 : i32
    %c0_i32 = arith.constant 0 : i32
    %c0_i32_0 = arith.constant 0 : i32
    return %c0_i32, %1 : i32, i32
  }
  func.func @transform_1(%arg0: i32, %arg1: i32) -> (i32, i32, i32) {
    %c0_i32 = arith.constant 0 : i32
    %c0_i32_0 = arith.constant 0 : i32
    %c0_i32_1 = arith.constant 0 : i32
    return %arg0, %c0_i32, %c0_i32_0 : i32, i32, i32
  }
}

</mosaic_0001>

<llo_original>
// kernel: tpu_custom_call.1
$region0: #{tpu_custom_call.1}
  #allocation0 [shape = 'u32[]', space=smem, size = 0x4, offset = 0x4, fixed_abs, tag = 'smem constant byte address 0x4 - core index']
  #allocation1 [shape = 'u32[72,128]{1,0:T(1,128)}', space=vmem, size = 0x9000, scoped, tag = 'internal scratch']
  %s0 = inlined_call_operand.hbm [shape: f32[8,64], index: 0, kind: input, shape index: {}]
  %s1 = inlined_call_operand.hbm [shape: f32[1,8,8], index: 1, kind: output, shape index: {}]
  %s2 = sld [smem:[#allocation0]]
  $region22: #{tpu_custom_call.1} parent=0
    _
  %s4 = ssub.s32 1, %s2
  %s5 = scalar_select 0, %s4, %s2
  $region1: #{tpu_custom_call.1} parent=0
    #allocation2 [shape = 'u8[4096]{0}', space=vmem, size = 0x1000, scoped, tag = 'input window, operand 0, single buffered']
    #allocation3 [shape = 's32[1]{0}', space=sflag, size = 0x4, scoped, tag = 'scoped memory for tpu_custom_call.1']
    #allocation4 [shape = 's32[1]{0}', space=sflag, size = 0x4, scoped, tag = 'scoped memory for tpu_custom_call.1']
    #allocation5 [shape = 'u8[4096]{0}', space=vmem, size = 0x1000, scoped, tag = 'output window, operand 0, single buffered']
    %6 = vsyncpa [#allocation3], 0
    %7 = vsyncpa [#allocation4], 0
    // Predicated region
    $region2: #{tpu_custom_call.1} parent=1 // pred_check
      _
    $region3: #{tpu_custom_call.1} parent=1 // pred_check_branch
      %9 = sbr.rel (0) target = $region5
    $region4: #{tpu_custom_call.1} parent=1 // pred_region
      %s10 = sadd.s32 0, 0
      %12 = vsyncadd [#allocation3], 0
      %s13 = smul.addr %s10, 8
      %s14 = scalar_lea.hbm %s0, %s13
      %s16 = sshll.u32 %s14, 4
      %s17 = int_to_ptr.hbm [resolvable:$true] %s16
      %s18 = sshll.u32 [#allocation2], 4
      %s19 = int_to_ptr.vmem [resolvable:$true] %s18
      %21 = dma.hbm_to_vmem [thread:$0]  %s17, 128, %s19, [#allocation3]
    $region5: #{tpu_custom_call.1} parent=1 // pred_fallthru
      _
    // Predicated region
    $region6: #{tpu_custom_call.1} parent=1 // pred_check
      _
    $region7: #{tpu_custom_call.1} parent=1 // pred_check_branch
      %23 = sbr.rel (0) target = $region9
    $region8: #{tpu_custom_call.1} parent=1 // pred_region
      %25 = dma.done [#allocation3], 128
    $region9: #{tpu_custom_call.1} parent=1 // pred_fallthru
      _
    %s26 = sadd.s32 0, 0
    %p27 = scmp.eq.s32.totalorder 0, 0
    // Predicated region
    $region10: #{tpu_custom_call.1} parent=1 // pred_check
      %p28 = pneg %p27
    $region11: #{tpu_custom_call.1} parent=1 // pred_check_branch
      %30 = sbr.rel (%p28) target = $region13
    $region12: #{tpu_custom_call.1} parent=1 // pred_region
      %vm31 = vcmask 64512
      %32 = vst.msk [vmem:[#allocation5] sm:$0xff] %vm31, 0.0
    $region13: #{tpu_custom_call.1} parent=1 // pred_fallthru
      _
    %v33 = vlaneseq
    %v34 = vand.u32 %v33, 127
    %v35 = vld [vmem:[#allocation2] sm:$0xff]
    %v36 = vperm.slane %v35, 0
    %v37 = vsub.f32 %v35, %v36
    %v38 = vand.u32 2147483647, %v37
    %vm39 = vcmask 523264
    %v40 = vsel %vm39, %v38, 0.0
    %41 = vadd.xlane.f32.xlu0 %v40
    %v42 = vpop.xlane.xlu0 %41
    %vm43 = vcmp.eq.s32.totalorder %v34, 0
    %v44 = vsel %vm43, %v42, 0.0
    %v45 = vadd.f32 %v44, 0.0
    %v46 = vperm.slane %v35, 1
    %v47 = vsub.f32 %v35, %v46
    %v48 = vand.u32 2147483647, %v47
    %v49 = vsel %vm39, %v48, 0.0
    %50 = vadd.xlane.f32.xlu0 %v49
    %v51 = vpop.xlane.xlu0 %50
    %vm52 = vcmp.eq.s32.totalorder %v34, 1
    %v53 = vsel %vm52, %v51, 0.0
    %v54 = vadd.f32 %v45, %v53
    %v55 = vperm.slane %v35, 2
    %v56 = vsub.f32 %v35, %v55
    %v57 = vand.u32 2147483647, %v56
    %v58 = vsel %vm39, %v57, 0.0
    %59 = vadd.xlane.f32.xlu0 %v58
    %v60 = vpop.xlane.xlu0 %59
    %vm61 = vcmp.eq.s32.totalorder %v34, 2
    %v62 = vsel %vm61, %v60, 0.0
    %v63 = vadd.f32 %v54, %v62
    %v64 = vperm.slane %v35, 3
    %v65 = vsub.f32 %v35, %v64
    %v66 = vand.u32 2147483647, %v65
    %v67 = vsel %vm39, %v66, 0.0
    %68 = vadd.xlane.f32.xlu0 %v67
    %v69 = vpop.xlane.xlu0 %68
    %vm70 = vcmp.eq.s32.totalorder %v34, 3
    %v71 = vsel %vm70, %v69, 0.0
    %v72 = vadd.f32 %v63, %v71
    %v73 = vperm.slane %v35, 4
    %v74 = vsub.f32 %v35, %v73
    %v75 = vand.u32 2147483647, %v74
    %v76 = vsel %vm39, %v75, 0.0
    %77 = vadd.xlane.f32.xlu0 %v76
    %v78 = vpop.xlane.xlu0 %77
    %vm79 = vcmp.eq.s32.totalorder %v34, 4
    %v80 = vsel %vm79, %v78, 0.0
    %v81 = vadd.f32 %v72, %v80
    %v82 = vperm.slane %v35, 5
    %v83 = vsub.f32 %v35, %v82
    %v84 = vand.u32 2147483647, %v83
    %v85 = vsel %vm39, %v84, 0.0
    %86 = vadd.xlane.f32.xlu0 %v85
    %v87 = vpop.xlane.xlu0 %86
    %vm88 = vcmp.eq.s32.totalorder %v34, 5
    %v89 = vsel %vm88, %v87, 0.0
    %v90 = vadd.f32 %v81, %v89
    %v91 = vperm.slane %v35, 6
    %v92 = vsub.f32 %v35, %v91
    %v93 = vand.u32 2147483647, %v92
    %v94 = vsel %vm39, %v93, 0.0
    %95 = vadd.xlane.f32.xlu0 %v94
    %v96 = vpop.xlane.xlu0 %95
    %vm97 = vcmp.eq.s32.totalorder %v34, 6
    %v98 = vsel %vm97, %v96, 0.0
    %v99 = vadd.f32 %v90, %v98
    %v100 = vperm.slane %v35, 7
    %v101 = vsub.f32 %v35, %v100
    %v102 = vand.u32 2147483647, %v101
    %v103 = vsel %vm39, %v102, 0.0
    %104 = vadd.xlane.f32.xlu0 %v103
    %v105 = vpop.xlane.xlu0 %104
    %vm106 = vcmp.eq.s32.totalorder %v34, 7
    %v107 = vsel %vm106, %v105, 0.0
    %v108 = vadd.f32 %v99, %v107
    %v109 = vld [vmem:[#allocation5] sm:$0xff]
    %v110 = vadd.f32 %v109, %v108
    %vm111 = vcmask 64512
    %112 = vst.msk [vmem:[#allocation5] sm:$0xff] %vm111, %v110
    // Predicated region
    $region14: #{tpu_custom_call.1} parent=1 // pred_check
      _
    $region15: #{tpu_custom_call.1} parent=1 // pred_check_branch
      %114 = sbr.rel (0) target = $region17
    $region16: #{tpu_custom_call.1} parent=1 // pred_region
      %116 = vsyncadd [#allocation4], 0
      %s118 = sshll.u32 [#allocation5], 4
      %s119 = int_to_ptr.vmem [resolvable:$true] %s118
      %s120 = sshll.u32 %s1, 4
      %s121 = int_to_ptr.hbm [resolvable:$true] %s120
      %123 = dma.vmem_to_hbm [thread:$0]  %s119, 128, %s121, [#allocation4]
    $region17: #{tpu_custom_call.1} parent=1 // pred_fallthru
      _
    // Predicated region
    $region18: #{tpu_custom_call.1} parent=1 // pred_check
      _
    $region19: #{tpu_custom_call.1} parent=1 // pred_check_branch
      %125 = sbr.rel (0) target = $region21
    $region20: #{tpu_custom_call.1} parent=1 // pred_region
      %127 = dma.done [#allocation4], 128
    $region21: #{tpu_custom_call.1} parent=1 // pred_fallthru
      _
    %128 = vsyncpa [#allocation3], 1
    %129 = vsyncpa [#allocation4], 1

</llo_original>
